<compile_context>
chip_gen: v5e
topology: v5e:2x2
jax: 0.10.0
libtpu: 0.0.40
codegen_flags: <defaults>
</compile_context>

<pallas_src>
import functools

import jax
import jax.numpy as jnp
from jax.experimental import pallas as pl
from jax.experimental.pallas import tpu as pltpu


def _en_dist_kernel(x_ref, wc_ref, mn_ref, na_ref, out_ref):
    # x_ref  : (TR, P*E*D)   packed electron coords (P batch elems per row)
    # wc_ref : (P*E*D, P*E*A) block-diag(-2 * atoms^T) over the P*E slots
    # mn_ref : (P*E*D, P*E*A) block-diag(ones(D,A)) -> per-electron |x|^2
    # na_ref : (1, P*E*A)     per-atom squared norms, tiled over P*E slots
    # out_ref: (TR, P*E*A)    packed distances
    x = x_ref[...]
    cross = jnp.dot(x, wc_ref[...], preferred_element_type=jnp.float32)       # -2 x.a
    norm_e = jnp.dot(x * x, mn_ref[...], preferred_element_type=jnp.float32)  # |x_e|^2
    d2 = norm_e + cross + na_ref[...]
    # clamp: quadratic expansion can go slightly negative near a nucleus.
    out_ref[...] = jnp.sqrt(jnp.maximum(d2, 0.0)).astype(out_ref.dtype)


def _round_up(x, m):
    return -(-x // m) * m


def _choose_row_tile(nrows, lanes_in, lanes_out):
    """Row tile from a VMEM budget; >=2 grid steps; multiple of 8 if partial."""
    if nrows <= 8:
        return nrows
    budget = 24 << 20                                  # safe vs v7x scoped VMEM
    per_row = 2 * 4 * (lanes_in + lanes_out)           # double-buffered x + out
    tile = budget // per_row
    tile = min(tile, 32768)                            # overhead long amortized
    tile = min(tile, _round_up(-(-nrows // 2), 8))     # >=2 steps for v7x 2 TCs
    tile = max(tile, 8)
    if tile >= nrows:
        return nrows
    return max(8, (tile // 8) * 8)


@functools.partial(jax.jit, static_argnames=("row_tile", "vmem_bytes"))
def _en_dist_forward(xp, wc, mn, na, *, row_tile, vmem_bytes):
    nrows, li = xp.shape
    lo = wc.shape[1]
    grid = (pl.cdiv(nrows, row_tile),)

    cost = pl.CostEstimate(
        flops=4 * nrows * li * lo // max(li // 8, 1),   # advisory only
        transcendentals=nrows * lo,
        bytes_accessed=4 * (nrows * li + nrows * lo + wc.size + mn.size + na.size),
    )

    return pl.pallas_call(
        _en_dist_kernel,
        out_shape=jax.ShapeDtypeStruct((nrows, lo), jnp.float32),
        grid=grid,
        in_specs=[
            pl.BlockSpec((row_tile, li), lambda i: (i, 0)),
            pl.BlockSpec((li, lo), lambda i: (0, 0)),
            pl.BlockSpec((li, lo), lambda i: (0, 0)),
            pl.BlockSpec((1, lo), lambda i: (0, 0)),
        ],
        out_specs=pl.BlockSpec((row_tile, lo), lambda i: (i, 0)),
        compiler_params=pltpu.CompilerParams(
            dimension_semantics=("parallel",),
            vmem_limit_bytes=vmem_bytes,
        ),
        cost_estimate=cost,
    )(xp, wc, mn, na)


class ElectronNucleiDistance:
    """JAX/Pallas port of qmctorch ElectronNucleiDistance."""

    def __init__(self, nelec, atomic_pos, ndim=3, scale=False, scale_factor=0.6):
        self.nelec = int(nelec)
        self.ndim = int(ndim)
        self.scale = bool(scale)
        self.kappa = float(scale_factor)
        self.eps = 1e-6  # float32 default dtype

        self.atoms = jnp.asarray(atomic_pos, dtype=jnp.float32)  # (A, D)
        self.natom = int(self.atoms.shape[0])
        self._const_cache = {}

    # --- packing / constants ---------------------------------------------
    def _pick_pack(self, nbatch):
        width = max(self.nelec * self.ndim, self.nelec * self.natom, 1)
        pmax = max(1, 128 // width)
        for p in range(min(pmax, nbatch), 0, -1):
            if nbatch % p == 0:          # exact divisor -> reshape stays free
                return p
        return 1

    def _get_consts(self, pack):
        if pack not in self._const_cache:
            d, a = self.ndim, self.natom
            eye = jnp.eye(pack * self.nelec, dtype=jnp.float32)
            wc = jnp.kron(eye, -2.0 * self.atoms.T)                    # (P*E*D, P*E*A)
            mn = jnp.kron(eye, jnp.ones((d, a), jnp.float32))          # (P*E*D, P*E*A)
            na = jnp.tile(jnp.sum(self.atoms * self.atoms, axis=-1),
                          pack * self.nelec).reshape(1, pack * self.nelec * a)
            self._const_cache[pack] = (wc, mn, na)
        return self._const_cache[pack]

    # --- forward -----------------------------------------------------------
    def __call__(self, inp, derivative=0):
        e, d, a = self.nelec, self.ndim, self.natom
        x = jnp.asarray(inp, jnp.float32).reshape(-1, e * d)
        b = x.shape[0]

        pack = self._pick_pack(b)
        wc, mn, na = self._get_consts(pack)
        xp = x.reshape(b // pack, pack * e * d)        # free row-major reshape
        li, lo = pack * e * d, pack * e * a

        tile = _choose_row_tile(xp.shape[0], li, lo)
        vmem = 8 * tile * (li + lo) + 16 * (li * lo + lo) + (4 << 20)
        vmem = int(min(max(vmem, 16 << 20), 64 << 20))

        out = _en_dist_forward(xp, wc, mn, na, row_tile=tile, vmem_bytes=vmem)
        dist = out.reshape(b, e, a)                    # free row-major reshape

        if self.scale:
            # TODO(synk): get_scaled_distance / scaled-derivative helpers live
            # outside the reference module and are not ported.
            raise NotImplementedError("scale=True path not ported")

        if derivative == 0:
            return dist

        epos = x.reshape(b, e, d)
        if derivative == 1:
            return self._get_der_distance(epos, dist)
        if derivative == 2:
            return self._get_second_der_distance(epos, dist)
        raise ValueError("derivative must be 0, 1 or 2")

    # --- derivative paths: plain JAX (elementwise / transpose work) ---------
    # TODO(synk): if derivative=1/2 becomes a hot path, emit invr from the
    # kernel as a second output instead of re-reading dist/epos here.
    def _get_der_distance(self, epos, dist):
        invr = (1.0 / (dist + self.eps))[..., None]                 # (B, E, A, 1)
        diff = epos[..., None] - self.atoms.T                       # (B, E, D, A)
        diff = jnp.transpose(diff, (0, 1, 3, 2))                    # (B, E, A, D)
        return jnp.transpose(diff * invr, (0, 3, 1, 2))             # (B, D, E, A)

    def _get_second_der_distance(self, epos, dist):
        invr3 = (1.0 / (dist ** 3 + self.eps))[:, None]             # (B, 1, E, A)
        da = jnp.transpose(epos, (0, 2, 1))[..., None]              # (B, D, E, 1)
        da = (da - self.atoms.T[:, None, :]) ** 2                   # (B, D, E, A)
        sel = jnp.array([[1, 2], [2, 0], [0, 1]], dtype=jnp.int32)
        da = da[:, sel].sum(axis=2)                                 # (B, 3, E, A)
        return da * invr3


def _reference(inp, atoms, nelec, ndim):
    """Pure-JAX reference matching the PyTorch quadratic-expansion path."""
    epos = inp.reshape(-1, nelec, ndim)
    norm = jnp.sum(epos ** 2, axis=-1, keepdims=True)               # (B, E, 1)
    norm_atom = jnp.sum(atoms ** 2, axis=-1)[None, None, :]         # (1, 1, A)
    d2 = norm + norm_atom - 2.0 * jnp.einsum("bed,ad->bea", epos, atoms)
    return jnp.sqrt(d2)


if __name__ == "__main__":
    nbatch, nelec, ndim, natom = 320, 4, 3, 2

    key = jax.random.PRNGKey(0)
    k_atoms, k_epos = jax.random.split(key)
    atomic_pos = jax.random.normal(k_atoms, (natom, ndim), dtype=jnp.float32) * 2.0
    epos_flat = jax.random.normal(k_epos, (nbatch, nelec * ndim), dtype=jnp.float32)

    endist = ElectronNucleiDistance(nelec, atomic_pos, ndim=ndim)
    # pack=10 -> packed rows 32, row tile 16 -> 2 grid steps exercised.
    r = jax.block_until_ready(endist(epos_flat))

    r_ref = _reference(epos_flat, atomic_pos, nelec, ndim)
    assert r.shape == (nbatch, nelec, natom)
    assert jnp.allclose(r, r_ref, atol=1e-4, rtol=1e-4), "mismatch vs reference"

    dr = jax.block_until_ready(endist(epos_flat, derivative=1))
    assert dr.shape == (nbatch, ndim, nelec, natom)
    d2r = jax.block_until_ready(endist(epos_flat, derivative=2))
    assert d2r.shape == (nbatch, ndim, nelec, natom)

    print("KERNEL_OK")
</pallas_src>

<mosaic_0001>
module attributes {stable_mosaic.version = 11 : i64} {
  func.func @_en_dist_kernel(%arg0: i32, %arg1: memref<16x120xf32, #tpu.memory_space<vmem>>, %arg2: memref<120x80xf32, #tpu.memory_space<vmem>>, %arg3: memref<120x80xf32, #tpu.memory_space<vmem>>, %arg4: memref<1x80xf32, #tpu.memory_space<vmem>>, %arg5: memref<16x80xf32, #tpu.memory_space<vmem>>) attributes {dimension_semantics = [#tpu.dimension_semantics<parallel>], iteration_bounds = array<i64: 2>, scalar_prefetch = 0 : i64, scratch_operands = 0 : i64, tpu.core_type = #tpu.core_type<tc>, window_params = [{transform_indices = @transform_0, window_bounds = array<i64: 16, 120>}, {pipeline_mode = #tpu.pipeline_mode<synchronous>, transform_indices = @transform_1, window_bounds = array<i64: 120, 80>}, {pipeline_mode = #tpu.pipeline_mode<synchronous>, transform_indices = @transform_2, window_bounds = array<i64: 120, 80>}, {pipeline_mode = #tpu.pipeline_mode<synchronous>, transform_indices = @transform_3, window_bounds = array<i64: 1, 80>}, {transform_indices = @transform_4, window_bounds = array<i64: 16, 80>}]} {
    %c0 = arith.constant 0 : index
    %c0_0 = arith.constant 0 : index
    %0 = vector.load %arg1[%c0, %c0_0] : memref<16x120xf32, #tpu.memory_space<vmem>>, vector<16x120xf32>
    %c0_1 = arith.constant 0 : index
    %c0_2 = arith.constant 0 : index
    %1 = vector.load %arg2[%c0_1, %c0_2] : memref<120x80xf32, #tpu.memory_space<vmem>>, vector<120x80xf32>
    %cst = arith.constant dense<0.000000e+00> : vector<16x80xf32>
    %2 = tpu.matmul %0, %1, %cst {dimension_numbers = #tpu.dot_dimension_numbers<[1], [0], [0], [1], [0, 0, 1, 1], [], []>} : vector<16x120xf32>, vector<120x80xf32>, vector<16x80xf32> -> vector<16x80xf32>
    %3 = arith.mulf %0, %0 : vector<16x120xf32>
    %c0_3 = arith.constant 0 : index
    %c0_4 = arith.constant 0 : index
    %4 = vector.load %arg3[%c0_3, %c0_4] : memref<120x80xf32, #tpu.memory_space<vmem>>, vector<120x80xf32>
    %cst_5 = arith.constant dense<0.000000e+00> : vector<16x80xf32>
    %5 = tpu.matmul %3, %4, %cst_5 {dimension_numbers = #tpu.dot_dimension_numbers<[1], [0], [0], [1], [0, 0, 1, 1], [], []>} : vector<16x120xf32>, vector<120x80xf32>, vector<16x80xf32> -> vector<16x80xf32>
    %6 = arith.addf %5, %2 : vector<16x80xf32>
    %c0_6 = arith.constant 0 : index
    %c0_7 = arith.constant 0 : index
    %7 = vector.load %arg4[%c0_6, %c0_7] : memref<1x80xf32, #tpu.memory_space<vmem>>, vector<1x80xf32>
    %8 = vector.broadcast %7 : vector<1x80xf32> to vector<16x80xf32>
    %9 = arith.addf %6, %8 : vector<16x80xf32>
    %cst_8 = arith.constant 0.000000e+00 : f32
    %10 = vector.broadcast %cst_8 : f32 to vector<16x80xf32>
    %11 = arith.maximumf %9, %10 : vector<16x80xf32>
    %12 = math.sqrt %11 : vector<16x80xf32>
    %c0_9 = arith.constant 0 : index
    %c0_10 = arith.constant 0 : index
    %13 = vector.load %arg5[%c0_9, %c0_10] : memref<16x80xf32, #tpu.memory_space<vmem>>, vector<16x80xf32>
    tpu.vector_store %arg5[%c0_9, %c0_10], %12 {strides = array<i32>} : memref<16x80xf32, #tpu.memory_space<vmem>>, vector<16x80xf32>,
    return
  }
  func.func @transform_0(%arg0: i32) -> (i32, i32) {
    %c0_i32 = arith.constant 0 : i32
    %c0_i32_0 = arith.constant 0 : i32
    return %arg0, %c0_i32 : i32, i32
  }
  func.func @transform_1(%arg0: i32) -> (i32, i32) {
    %c0_i32 = arith.constant 0 : i32
    %c0_i32_0 = arith.constant 0 : i32
    %c0_i32_1 = arith.constant 0 : i32
    return %c0_i32, %c0_i32_0 : i32, i32
  }
  func.func @transform_2(%arg0: i32) -> (i32, i32) {
    %c0_i32 = arith.constant 0 : i32
    %c0_i32_0 = arith.constant 0 : i32
    %c0_i32_1 = arith.constant 0 : i32
    return %c0_i32, %c0_i32_0 : i32, i32
  }
  func.func @transform_3(%arg0: i32) -> (i32, i32) {
    %c0_i32 = arith.constant 0 : i32
    %c0_i32_0 = arith.constant 0 : i32
    %c0_i32_1 = arith.constant 0 : i32
    return %c0_i32, %c0_i32_0 : i32, i32
  }
  func.func @transform_4(%arg0: i32) -> (i32, i32) {
    %c0_i32 = arith.constant 0 : i32
    %c0_i32_0 = arith.constant 0 : i32
    return %arg0, %c0_i32 : i32, i32
  }
}

</mosaic_0001>

<llo_original>
// kernel: _en_dist_forward.1
$region0: #{_en_dist_forward.1}
  #allocation0 [shape = 'u32[]', space=smem, size = 0x4, offset = 0x4, fixed_abs, tag = 'smem constant byte address 0x4 - core index']
  #allocation1 [shape = 'u32[72,128]{1,0:T(1,128)}', space=vmem, size = 0x9000, scoped, tag = 'internal scratch']
  %s0 = inlined_call_operand.vmem [shape: f32[32,120], index: 0, kind: input, shape index: {}]
  %s1 = inlined_call_operand.vmem [shape: f32[120,80], index: 1, kind: input, shape index: {}]
  %s2 = inlined_call_operand.vmem [shape: f32[120,80], index: 2, kind: input, shape index: {}]
  %s3 = inlined_call_operand.vmem [shape: f32[1,80], index: 3, kind: input, shape index: {}]
  %s4 = inlined_call_operand.hbm [shape: f32[32,80], index: 4, kind: output, shape index: {}]
  %s5 = sld [smem:[#allocation0]]
  $region49: #{_en_dist_forward.1} parent=0
    _
  %s7 = ssub.s32 1, %s5
  %s8 = scalar_select 0, %s7, %s5
  $region1: #{_en_dist_forward.1} parent=0
    #allocation2 [shape = 'u8[16384]{0}', space=vmem, size = 0x4000, scoped, tag = 'output window, operand 0']
    #allocation3 [shape = 's32[2]{0}', space=sflag, size = 0x8, scoped, tag = 'scoped memory for _en_dist_forward.1']
    %9 = vsyncpa [#allocation3], 0
    %s10 = scalar_lea.sflag [#allocation3], 1
    %11 = vsyncpa %s10, 0
    loop: start=0, step=1, limit=4
    $region2: #{_en_dist_forward.1} parent=1 // loop_pre_header
      _
    $region3: #{_en_dist_forward.1} parent=1 // loop_header
      %s13 = sphi 0, %s17
      %p14 = scmp.ge.s32.totalorder %s13, 4
      %s23 = sphi 0, %s25
      %s26 = sphi 0, %s23
      %s27 = sphi 0, %s26
      %s43 = sphi 0, %s27
      %s47 = sphi 0, %s47
      %s49 = sphi 0, %s47
      %s50 = sphi 0, %s49
      %s64 = sphi 0, %s50
      %s68 = sphi 0, %s68
      %s70 = sphi 0, %s68
      %s71 = sphi 0, %s70
      %s85 = sphi 0, %s71
      %s89 = sphi 0, %s89
      %s91 = sphi 0, %s89
      %s92 = sphi 0, %s91
      %s106 = sphi 0, %s92
      %s112 = sphi 0, %s114
      %s115 = sphi 0, %s112
      %s116 = sphi 0, %s115
      %s132 = sphi 0, %s116
    $region4: #{_en_dist_forward.1} parent=1 // loop_header_branch
      %16 = sbr.rel (%p14) target = $region8
    $region5: #{_en_dist_forward.1} parent=1 // loop_body
      %s18 = ssub.s32 %s13, 1
      %s19 = ssub.s32 %s13, 2
      %s20 = sadd.s32 %s13, 1
      %s21 = ssub.s32 %s13, %s20
      %p22 = scmp.eq.s32.totalorder %s21, 0
      %s24 = sadd.s32 %s23, 1
      %s25 = scalar_select %p22, %s23, %s24
      %p28 = pneg %p22
      %p29 = scmp.eq.s32.totalorder %s13, 1
      %p30 = por %p28, %p29
      %p31 = scmp.ne.s32.totalorder %s23, %s26
      %p32 = scmp.eq.s32.totalorder %s13, 0
      %p33 = por %p31, %p32
      %p34 = scmp.ne.s32.totalorder %s23, %s26
      %p35 = scmp.eq.s32.totalorder %s18, 1
      %p36 = por %p34, %p35
      %p37 = scmp.ne.s32.totalorder %s26, %s27
      %p38 = scmp.eq.s32.totalorder %s18, 0
      %p39 = por %p37, %p38
      %p40 = scmp.ne.s32.totalorder %s26, %s27
      %p41 = scmp.eq.s32.totalorder %s19, 1
      %p42 = por %p40, %p41
      %p44 = scmp.ne.s32.totalorder %s27, %s43
      %p45 = scmp.eq.s32.totalorder %s19, 0
      %p46 = por %p44, %p45
      %s48 = sadd.s32 %s47, 1
      %p51 = scmp.eq.s32.totalorder %s13, 1
      %p52 = scmp.ne.s32.totalorder %s47, %s49
      %p53 = scmp.eq.s32.totalorder %s13, 0
      %p54 = por %p52, %p53
      %p55 = scmp.ne.s32.totalorder %s47, %s49
      %p56 = scmp.eq.s32.totalorder %s18, 1
      %p57 = por %p55, %p56
      %p58 = scmp.ne.s32.totalorder %s49, %s50
      %p59 = scmp.eq.s32.totalorder %s18, 0
      %p60 = por %p58, %p59
      %p61 = scmp.ne.s32.totalorder %s49, %s50
      %p62 = scmp.eq.s32.totalorder %s19, 1
      %p63 = por %p61, %p62
      %p65 = scmp.ne.s32.totalorder %s50, %s64
      %p66 = scmp.eq.s32.totalorder %s19, 0
      %p67 = por %p65, %p66
      %s69 = sadd.s32 %s68, 1
      %p72 = scmp.eq.s32.totalorder %s13, 1
      %p73 = scmp.ne.s32.totalorder %s68, %s70
      %p74 = scmp.eq.s32.totalorder %s13, 0
      %p75 = por %p73, %p74
      %p76 = scmp.ne.s32.totalorder %s68, %s70
      %p77 = scmp.eq.s32.totalorder %s18, 1
      %p78 = por %p76, %p77
      %p79 = scmp.ne.s32.totalorder %s70, %s71
      %p80 = scmp.eq.s32.totalorder %s18, 0
      %p81 = por %p79, %p80
      %p82 = scmp.ne.s32.totalorder %s70, %s71
      %p83 = scmp.eq.s32.totalorder %s19, 1
      %p84 = por %p82, %p83
      %p86 = scmp.ne.s32.totalorder %s71, %s85
      %p87 = scmp.eq.s32.totalorder %s19, 0
      %p88 = por %p86, %p87
      %s90 = sadd.s32 %s89, 1
      %p93 = scmp.eq.s32.totalorder %s13, 1
      %p94 = scmp.ne.s32.totalorder %s89, %s91
      %p95 = scmp.eq.s32.totalorder %s13, 0
      %p96 = por %p94, %p95
      %p97 = scmp.ne.s32.totalorder %s89, %s91
      %p98 = scmp.eq.s32.totalorder %s18, 1
      %p99 = por %p97, %p98
      %p100 = scmp.ne.s32.totalorder %s91, %s92
      %p101 = scmp.eq.s32.totalorder %s18, 0
      %p102 = por %p100, %p101
      %p103 = scmp.ne.s32.totalorder %s91, %s92
      %p104 = scmp.eq.s32.totalorder %s19, 1
      %p105 = por %p103, %p104
      %p107 = scmp.ne.s32.totalorder %s92, %s106
      %p108 = scmp.eq.s32.totalorder %s19, 0
      %p109 = por %p107, %p108
      %s110 = ssub.s32 %s13, %s20
      %p111 = scmp.eq.s32.totalorder %s110, 0
      %s113 = sadd.s32 %s112, 1
      %s114 = scalar_select %p111, %s112, %s113
      %p117 = pneg %p111
      %p118 = scmp.eq.s32.totalorder %s13, 1
      %p119 = por %p117, %p118
      %p120 = scmp.ne.s32.totalorder %s112, %s115
      %p121 = scmp.eq.s32.totalorder %s13, 0
      %p122 = por %p120, %p121
      %p123 = scmp.ne.s32.totalorder %s112, %s115
      %p124 = scmp.eq.s32.totalorder %s18, 1
      %p125 = por %p123, %p124
      %p126 = scmp.ne.s32.totalorder %s115, %s116
      %p127 = scmp.eq.s32.totalorder %s18, 0
      %p128 = por %p126, %p127
      %p129 = scmp.ne.s32.totalorder %s115, %s116
      %p130 = scmp.eq.s32.totalorder %s19, 1
      %p131 = por %p129, %p130
      %p133 = scmp.ne.s32.totalorder %s116, %s132
      %p134 = scmp.eq.s32.totalorder %s19, 0
      %p135 = por %p133, %p134
      %p136 = scmp.le.s32.totalorder 1, %s13
      %p137 = scmp.lt.s32.totalorder %s13, 3
      %p138 = pnand %p136, %p137
      %p139 = pneg %p138
      // Predicated region
      $region9: #{_en_dist_forward.1} parent=5 // pred_check
        _
      $region10: #{_en_dist_forward.1} parent=5 // pred_check_branch
        %141 = sbr.rel (%p138) target = $region12
      $region11: #{_en_dist_forward.1} parent=5 // pred_region
        %s142 = ssub.s32 %s13, 1
        // Predicated region
        $region13: #{_en_dist_forward.1} parent=11 // pred_check
          %p143 = pneg %p60
        $region14: #{_en_dist_forward.1} parent=11 // pred_check_branch
          %145 = sbr.rel (%p143) target = $region16
        $region15: #{_en_dist_forward.1} parent=11 // pred_region
          _
        $region16: #{_en_dist_forward.1} parent=11 // pred_fallthru
          _
        // Predicated region
        $region17: #{_en_dist_forward.1} parent=11 // pred_check
          %p146 = pneg %p81
        $region18: #{_en_dist_forward.1} parent=11 // pred_check_branch
          %148 = sbr.rel (%p146) target = $region20
        $region19: #{_en_dist_forward.1} parent=11 // pred_region
          _
        $region20: #{_en_dist_forward.1} parent=11 // pred_fallthru
          _
        // Predicated region
        $region21: #{_en_dist_forward.1} parent=11 // pred_check
          %p149 = pneg %p102
        $region22: #{_en_dist_forward.1} parent=11 // pred_check_branch
          %151 = sbr.rel (%p149) target = $region24
        $region23: #{_en_dist_forward.1} parent=11 // pred_region
          _
        $region24: #{_en_dist_forward.1} parent=11 // pred_fallthru
          _
      $region12: #{_en_dist_forward.1} parent=5 // pred_fallthru
        _
      %p152 = scmp.lt.s32.totalorder %s13, 2
      // Predicated region
      $region25: #{_en_dist_forward.1} parent=5 // pred_check
        %p153 = pneg %p152
      $region26: #{_en_dist_forward.1} parent=5 // pred_check_branch
        %155 = sbr.rel (%p153) target = $region28
      $region27: #{_en_dist_forward.1} parent=5 // pred_region
        // Predicated region
        $region29: #{_en_dist_forward.1} parent=27 // pred_check
          %p156 = pneg %p33
        $region30: #{_en_dist_forward.1} parent=27 // pred_check_branch
          %158 = sbr.rel (%p156) target = $region32
        $region31: #{_en_dist_forward.1} parent=27 // pred_region
          %s159 = smul.u32 2, %s13
          %p160 = scmp.lt.s32.totalorder %s159, 3
          %s161 = scalar_select %p160, %s159, 3
          %s162 = smul.addr %s161, 8
          %s163 = scalar_lea.vmem %s0, %s162
          %s164 = smul.u32 2, %s13
        $region32: #{_en_dist_forward.1} parent=27 // pred_fallthru
          _
      $region28: #{_en_dist_forward.1} parent=5 // pred_fallthru
        _
      %p165 = scmp.le.s32.totalorder 1, %s13
      %p166 = scmp.lt.s32.totalorder %s13, 3
      %p167 = pnand %p165, %p166
      %p168 = pneg %p167
      // Predicated region
      $region33: #{_en_dist_forward.1} parent=5 // pred_check
        _
      $region34: #{_en_dist_forward.1} parent=5 // pred_check_branch
        %170 = sbr.rel (%p167) target = $region36
      $region35: #{_en_dist_forward.1} parent=5 // pred_region
        %s171 = ssub.s32 %s13, 1
        %s172 = smul.u32 2, %s18
        %p173 = scmp.lt.s32.totalorder %s172, 3
        %s174 = scalar_select %p173, %s172, 3
        %s175 = smul.addr %s174, 8
        %s176 = scalar_lea.vmem %s0, %s175
        %p177 = pneg %p39
        %p178 = pneg %p36
        %p179 = pneg %p60
        %p180 = pneg %p57
        %p181 = pneg %p81
        %p182 = pneg %p78
        %p183 = pneg %p102
        %p184 = pneg %p99
        %p185 = pneg %p128
        %p186 = pneg %p125
        %s187 = sand.u32 %s115, 1
        %s188 = scalar_lea.sflag [#allocation3], %s187
        %s189 = sand.u32 %s115, 1
        %s190 = smul.addr %s189, 16
        %s191 = scalar_lea.vmem [#allocation2], %s190
        %s192 = smul.u32 2, %s18
        %p193 = scmp.lt.s32.totalorder %s192, 3
        %s194 = scalar_select %p193, %s192, 3
        %s195 = smul.addr %s194, 8
        %s196 = scalar_lea.vmem %s0, %s195
        %s197 = smul.u32 2, %s18
        %s198 = smul.u32 2, %s18
        %v199 = vld [vmem:[%s196] sm:$0xff]
        %v200 = vld [vmem:[%s196 + $0x8] sm:$0xff]
        %v201 = vld [vmem:[%s1] sm:$0xff]
        %v202 = vld [vmem:[%s1 + $0x8] sm:$0xff]
        %v203 = vld [vmem:[%s1 + $0x10] sm:$0xff]
        %v204 = vld [vmem:[%s1 + $0x18] sm:$0xff]
        %v205 = vld [vmem:[%s1 + $0x20] sm:$0xff]
        %v206 = vld [vmem:[%s1 + $0x28] sm:$0xff]
        %v207 = vld [vmem:[%s1 + $0x30] sm:$0xff]
        %v208 = vld [vmem:[%s1 + $0x38] sm:$0xff]
        %v209 = vld [vmem:[%s1 + $0x40] sm:$0xff]
        %v210 = vld [vmem:[%s1 + $0x48] sm:$0xff]
        %v211 = vld [vmem:[%s1 + $0x50] sm:$0xff]
        %v212 = vld [vmem:[%s1 + $0x58] sm:$0xff]
        %v213 = vld [vmem:[%s1 + $0x60] sm:$0xff]
        %v214 = vld [vmem:[%s1 + $0x68] sm:$0xff]
        %v215 = vld [vmem:[%s1 + $0x70] sm:$0xff]
        %vm216 = vcmask 982016
        %v218 = vsel %vm216, %v199, 0
        %v221 = vsel %vm216, %v200, 0
        %223 = vmatpush.msra.mxu0 0.0
        %224 = vmatpush.msra.mxu0 %v215
        %225 = vmatpush.msra.mxu0 %v214
        %226 = vmatpush.msra.mxu0 %v213
        %227 = vmatpush.msra.mxu0 %v212
        %228 = vmatpush.msra.mxu0 %v211
        %229 = vmatpush.msra.mxu0 %v210
        %230 = vmatpush.msra.mxu0 %v209
        %231 = vmatpush.msra.mxu0 %v208
        %232 = vmatpush.msra.mxu0 %v207
        %233 = vmatpush.msra.mxu0 %v206
        %234 = vmatpush.msra.mxu0 %v205
        %235 = vmatpush.msra.mxu0 %v204
        %236 = vmatpush.msra.mxu0 %v203
        %237 = vmatpush.msra.mxu0 %v202
        %238 = vmatpush.msra.mxu0 %v201
        %239 = vmatmul.f32.gmra.mxu0 %v218
        %v240 = vpop.f32.mrf.mxu0
        %v241 = vadd.f32 0.0, %v240
        %242 = vmatmul.f32.gmra.mxu0 %v221
        %v243 = vpop.f32.mrf.mxu0
        %v244 = vadd.f32 0.0, %v243
        %245 = vdwg.mxu0
        %v246 = vmul.f32 %v199, %v199
        %v247 = vmul.f32 %v200, %v200
        %v248 = vld [vmem:[%s2] sm:$0xff]
        %v249 = vld [vmem:[%s2 + $0x8] sm:$0xff]
        %v250 = vld [vmem:[%s2 + $0x10] sm:$0xff]
        %v251 = vld [vmem:[%s2 + $0x18] sm:$0xff]
        %v252 = vld [vmem:[%s2 + $0x20] sm:$0xff]
        %v253 = vld [vmem:[%s2 + $0x28] sm:$0xff]
        %v254 = vld [vmem:[%s2 + $0x30] sm:$0xff]
        %v255 = vld [vmem:[%s2 + $0x38] sm:$0xff]
        %v256 = vld [vmem:[%s2 + $0x40] sm:$0xff]
        %v257 = vld [vmem:[%s2 + $0x48] sm:$0xff]
        %v258 = vld [vmem:[%s2 + $0x50] sm:$0xff]
        %v259 = vld [vmem:[%s2 + $0x58] sm:$0xff]
        %v260 = vld [vmem:[%s2 + $0x60] sm:$0xff]
        %v261 = vld [vmem:[%s2 + $0x68] sm:$0xff]
        %v262 = vld [vmem:[%s2 + $0x70] sm:$0xff]
        %v264 = vsel %vm216, %v246, 0
        %v267 = vsel %vm216, %v247, 0
        %269 = vmatpush.msra.mxu0 0.0
        %270 = vmatpush.msra.mxu0 %v262
        %271 = vmatpush.msra.mxu0 %v261
        %272 = vmatpush.msra.mxu0 %v260
        %273 = vmatpush.msra.mxu0 %v259
        %274 = vmatpush.msra.mxu0 %v258
        %275 = vmatpush.msra.mxu0 %v257
        %276 = vmatpush.msra.mxu0 %v256
        %277 = vmatpush.msra.mxu0 %v255
        %278 = vmatpush.msra.mxu0 %v254
        %279 = vmatpush.msra.mxu0 %v253
        %280 = vmatpush.msra.mxu0 %v252
        %281 = vmatpush.msra.mxu0 %v251
        %282 = vmatpush.msra.mxu0 %v250
        %283 = vmatpush.msra.mxu0 %v249
        %284 = vmatpush.msra.mxu0 %v248
        %285 = vmatmul.f32.gmra.mxu0 %v264
        %v286 = vpop.f32.mrf.mxu0
        %v287 = vadd.f32 %v241, %v286
        %288 = vmatmul.f32.gmra.mxu0 %v267
        %v289 = vpop.f32.mrf.mxu0
        %v290 = vadd.f32 %v244, %v289
        %291 = vdwg.mxu0
        %v292 = vld [vmem:[%s3] sm:$0x1]
        %v294 = vperm.slane %v292, 0
        %v296 = vadd.f32 %v287, %v294
        %v297 = vadd.f32 %v290, %v294
        %v298 = vmax.f32 %v296, 0.0
        %v299 = vmax.f32 %v297, 0.0
        %v300 = vrsqrt.pop %v298
        %v301 = vmul.f32 %v300, %v298
        %v302 = vmul.f32 %v301, %v300
        %v303 = vmul.f32 0.5, %v302
        %v304 = vsub.f32 1.5, %v303
        %v305 = vmul.f32 %v300, %v304
        %v306 = vmul.f32 %v298, %v305
        %vm307 = vcmp.eq.f32.partialorder %v298, inf
        %v308 = vsel %vm307, %v298, %v306
        %vm309 = vcmp.eq.f32.partialorder %v298, 0.0
        %v310 = vand.u32 %v298, 2147483648
        %v311 = vsel %vm309, %v310, %v308
        %v312 = vrsqrt.pop %v299
        %v313 = vmul.f32 %v312, %v299
        %v314 = vmul.f32 %v313, %v312
        %v315 = vmul.f32 0.5, %v314
        %v316 = vsub.f32 1.5, %v315
        %v317 = vmul.f32 %v312, %v316
        %v318 = vmul.f32 %v299, %v317
        %vm319 = vcmp.eq.f32.partialorder %v299, inf
        %v320 = vsel %vm319, %v299, %v318
        %vm321 = vcmp.eq.f32.partialorder %v299, 0.0
        %v322 = vand.u32 %v299, 2147483648
        %v323 = vsel %vm321, %v322, %v320
        %vm324 = vcmask 654336
        %325 = vst.msk [vmem:[%s191] sm:$0xff] %vm324, %v311
        %326 = vst.msk [vmem:[%s191 + $0x8] sm:$0xff] %vm324, %v323
        %s327 = sand.u32 %s115, 1
        %s328 = scalar_lea.sflag [#allocation3], %s327
        %s329 = sand.u32 %s115, 1
        %s330 = smul.addr %s329, 16
        %s331 = scalar_lea.vmem [#allocation2], %s330
        // Predicated region
        $region37: #{_en_dist_forward.1} parent=35 // pred_check
          %p332 = pneg %p125
        $region38: #{_en_dist_forward.1} parent=35 // pred_check_branch
          %334 = sbr.rel (%p332) target = $region40
        $region39: #{_en_dist_forward.1} parent=35 // pred_region
          %s335 = smul.u32 2, %s18
          %337 = vsyncadd %s328, 0
          %s338 = smul.addr %s335, 8
          %s339 = scalar_lea.hbm %s4, %s338
          %s340 = sshll.u32 %s331, 4
          %s341 = int_to_ptr.vmem [resolvable:$true] %s340
          %s342 = sshll.u32 %s339, 4
          %s343 = int_to_ptr.hbm [resolvable:$true] %s342
          %348 = dma.vmem_to_hbm [thread:$0]  %s341, 256, %s343, %s328, 128, 128, 8
        $region40: #{_en_dist_forward.1} parent=35 // pred_fallthru
          _
      $region36: #{_en_dist_forward.1} parent=5 // pred_fallthru
        _
      %p349 = scmp.le.s32.totalorder 2, %s13
      // Predicated region
      $region41: #{_en_dist_forward.1} parent=5 // pred_check
        %p350 = pneg %p349
      $region42: #{_en_dist_forward.1} parent=5 // pred_check_branch
        %352 = sbr.rel (%p350) target = $region44
      $region43: #{_en_dist_forward.1} parent=5 // pred_region
        %s353 = ssub.s32 %s13, 2
        // Predicated region
        $region45: #{_en_dist_forward.1} parent=43 // pred_check
          %p354 = pneg %p131
        $region46: #{_en_dist_forward.1} parent=43 // pred_check_branch
          %356 = sbr.rel (%p354) target = $region48
        $region47: #{_en_dist_forward.1} parent=43 // pred_region
          %s357 = sand.u32 %s116, 1
          %s358 = scalar_lea.sflag [#allocation3], %s357
          %s359 = sand.u32 %s116, 1
          %s360 = smul.addr %s359, 16
          %s361 = scalar_lea.vmem [#allocation2], %s360
          %363 = dma.done %s358, 256
        $region48: #{_en_dist_forward.1} parent=43 // pred_fallthru
          _
      $region44: #{_en_dist_forward.1} parent=5 // pred_fallthru
        _
    $region6: #{_en_dist_forward.1} parent=1 // loop_footer
      %s17 = sadd.s32 1, %s13
    $region7: #{_en_dist_forward.1} parent=1 // loop_footer_branch
      %12 = sbr.rel target = $region3
    $region8: #{_en_dist_forward.1} parent=1 // loop_exit
      _
    %364 = vsyncpa [#allocation3], 1
    %s365 = scalar_lea.sflag [#allocation3], 1
    %366 = vsyncpa %s365, 1

</llo_original>
